<compile_context>
chip_gen: v7x
topology: tpu7x:2x2x1
jax: 0.10.0
libtpu: 0.0.40
codegen_flags: <defaults>
</compile_context>

<pallas_src>
import functools

import jax
import jax.numpy as jnp
from jax.experimental import pallas as pl
from jax.experimental.pallas import tpu as pltpu


def _wise_iou_kernel(xp_ref, yp_ref, xgt_ref, ygt_ref, out_ref, *, coef, scale):
    # Load in native dtype, compute in f32 on the VPU/EUP, store in out dtype.
    xp = xp_ref[...].astype(jnp.float32)
    yp = yp_ref[...].astype(jnp.float32)
    xgt = xgt_ref[...].astype(jnp.float32)
    ygt = ygt_ref[...].astype(jnp.float32)

    dx = xp - xgt
    dy = yp - ygt
    d2 = dx * dx + dy * dy
    # exp(d2/(b^2+g^2))**delta == exp(d2 * delta/(b^2+g^2))  (exact: exp > 0)
    out_ref[...] = (coef * jnp.exp(d2 * scale)).astype(out_ref.dtype)


def _round_up(x, m):
    return ((x + m - 1) // m) * m


def _num_tensorcores():
    """Best-effort TensorCore-per-device count; falls back to 1 (safe)."""
    try:
        info = pltpu.get_tpu_info()
        for name in ("num_cores", "core_count", "num_tensorcores",
                     "tensorcores_per_chip"):
            v = getattr(info, name, None)
            if v:
                return max(1, int(v))
    except Exception:
        pass
    try:
        d = jax.devices()[0]
        for name in ("num_cores", "core_count"):
            v = getattr(d, name, None)
            if v:
                return max(1, int(v))
    except Exception:
        pass
    return 1


def wise_iou_loss(x_p, y_p, x_gt, y_gt, W_p, H_p, W_gt, H_gt,
                  *, alpha, beta, delta, gamma, block_rows=2048):
    """Pallas implementation of WiseIoULoss.forward.

    W_p/H_p/W_gt/H_gt are accepted for signature parity but (as in the PyTorch
    module) do not influence the returned loss.
    """
    del W_p, H_p, W_gt, H_gt  # only used in the unused S_u term
    orig_shape = x_p.shape
    orig_dtype = x_p.dtype

    # Trace-time constant folding of the hyperparameters.
    coef = float(1.0 - beta * alpha * beta * alpha * gamma)
    scale = float(delta / (beta * beta + gamma * gamma))

    # Flatten to a lane-dense (rows, 128) slab. Pad only to lane granularity
    # (< 128 elements) and only when actually needed.
    lanes = 128
    n = x_p.size
    rows = pl.cdiv(n, lanes)
    pad = rows * lanes - n

    def prep(a):
        a = a.reshape(-1)
        if pad:
            a = jnp.pad(a, (0, pad))
        return a.reshape(rows, lanes)

    xp2, yp2, xgt2, ygt2 = map(prep, (x_p, y_p, x_gt, y_gt))

    # Tile selection (core-count aware).  Single-TC chips (v5e/v6e): biggest
    # tile that fits, no artificial splitting.  Multi-TC chips (v7x): split so
    # every core gets >= 2 grid steps and DMA can pipeline behind compute.
    cores = _num_tensorcores()
    if rows <= 8:
        tr = rows  # block equals full sublane extent; no 8-row alignment needed
    elif cores > 1 and rows >= 16 * cores:
        tr = min(int(block_rows), _round_up(pl.cdiv(rows, 2 * cores), 8))
    else:
        tr = min(int(block_rows), _round_up(rows, 8))
    grid = pl.cdiv(rows, tr)  # ragged last block handled by Pallas boundary masking

    kernel = functools.partial(_wise_iou_kernel, coef=coef, scale=scale)
    spec = pl.BlockSpec((tr, lanes), lambda i: (i, 0))

    out = pl.pallas_call(
        kernel,
        out_shape=jax.ShapeDtypeStruct((rows, lanes), orig_dtype),
        grid_spec=pltpu.PrefetchScalarGridSpec(
            num_scalar_prefetch=0,
            grid=(grid,),
            in_specs=[spec, spec, spec, spec],
            out_specs=spec,
        ),
        compiler_params=pltpu.CompilerParams(
            dimension_semantics=("parallel",),
            vmem_limit_bytes=24 * 1024 * 1024,
        ),
    )(xp2, yp2, xgt2, ygt2)

    out = out.reshape(-1)
    if pad:
        out = out[:n]
    return out.reshape(orig_shape)


def _reference(x_p, y_p, x_gt, y_gt, alpha, beta, delta, gamma):
    coef = 1.0 - beta * alpha * beta * alpha * gamma
    return coef * jnp.exp(
        ((x_p - x_gt) ** 2 + (y_p - y_gt) ** 2) / (beta ** 2 + gamma ** 2)
    ) ** delta


if __name__ == "__main__":
    key = jax.random.PRNGKey(0)
    k1, k2, k3, k4, k5, k6, k7, k8 = jax.random.split(key, 8)

    # Small box-coordinate-like tensors: (batch=2, boxes=4, H=16, W=16)
    shape = (2, 4, 16, 16)
    x_p = jax.random.uniform(k1, shape, dtype=jnp.float32)
    y_p = jax.random.uniform(k2, shape, dtype=jnp.float32)
    x_gt = jax.random.uniform(k3, shape, dtype=jnp.float32)
    y_gt = jax.random.uniform(k4, shape, dtype=jnp.float32)
    W_p = jax.random.uniform(k5, shape, dtype=jnp.float32) + 1.0
    H_p = jax.random.uniform(k6, shape, dtype=jnp.float32) + 1.0
    W_gt = jax.random.uniform(k7, shape, dtype=jnp.float32) + 1.0
    H_gt = jax.random.uniform(k8, shape, dtype=jnp.float32) + 1.0

    # Deterministic hyperparameters (module __init__ args).
    alpha, beta, delta, gamma = 1.9, 0.5, 3.0, 0.5

    loss = wise_iou_loss(x_p, y_p, x_gt, y_gt, W_p, H_p, W_gt, H_gt,
                         alpha=alpha, beta=beta, delta=delta, gamma=gamma)
    loss = jax.block_until_ready(loss)

    ref = _reference(x_p, y_p, x_gt, y_gt, alpha, beta, delta, gamma)
    assert loss.shape == shape and loss.dtype == jnp.float32
    assert jnp.allclose(loss, ref, rtol=1e-5, atol=1e-5), "mismatch vs reference"
    print("KERNEL_OK")
</pallas_src>

<mosaic_0001>
module attributes {stable_mosaic.version = 11 : i64} {
  func.func @_wise_iou_kernel(%arg0: i32, %arg1: memref<16x128xf32, #tpu.memory_space<vmem>>, %arg2: memref<16x128xf32, #tpu.memory_space<vmem>>, %arg3: memref<16x128xf32, #tpu.memory_space<vmem>>, %arg4: memref<16x128xf32, #tpu.memory_space<vmem>>, %arg5: memref<16x128xf32, #tpu.memory_space<vmem>>) attributes {dimension_semantics = [#tpu.dimension_semantics<parallel>], iteration_bounds = array<i64: 1>, scalar_prefetch = 0 : i64, scratch_operands = 0 : i64, tpu.core_type = #tpu.core_type<tc>, window_params = [{transform_indices = @transform_0, window_bounds = array<i64: 16, 128>}, {transform_indices = @transform_1, window_bounds = array<i64: 16, 128>}, {transform_indices = @transform_2, window_bounds = array<i64: 16, 128>}, {transform_indices = @transform_3, window_bounds = array<i64: 16, 128>}, {transform_indices = @transform_4, window_bounds = array<i64: 16, 128>}]} {
    %c0 = arith.constant 0 : index
    %c0_0 = arith.constant 0 : index
    %0 = vector.load %arg1[%c0, %c0_0] : memref<16x128xf32, #tpu.memory_space<vmem>>, vector<16x128xf32>
    %c0_1 = arith.constant 0 : index
    %c0_2 = arith.constant 0 : index
    %1 = vector.load %arg2[%c0_1, %c0_2] : memref<16x128xf32, #tpu.memory_space<vmem>>, vector<16x128xf32>
    %c0_3 = arith.constant 0 : index
    %c0_4 = arith.constant 0 : index
    %2 = vector.load %arg3[%c0_3, %c0_4] : memref<16x128xf32, #tpu.memory_space<vmem>>, vector<16x128xf32>
    %c0_5 = arith.constant 0 : index
    %c0_6 = arith.constant 0 : index
    %3 = vector.load %arg4[%c0_5, %c0_6] : memref<16x128xf32, #tpu.memory_space<vmem>>, vector<16x128xf32>
    %4 = arith.subf %0, %2 : vector<16x128xf32>
    %5 = arith.subf %1, %3 : vector<16x128xf32>
    %6 = arith.mulf %4, %4 : vector<16x128xf32>
    %7 = arith.mulf %5, %5 : vector<16x128xf32>
    %8 = arith.addf %6, %7 : vector<16x128xf32>
    %cst = arith.constant 6.000000e+00 : f32
    %9 = vector.broadcast %cst : f32 to vector<16x128xf32>
    %10 = arith.mulf %8, %9 : vector<16x128xf32>
    %11 = math.exp %10 : vector<16x128xf32>
    %cst_7 = arith.constant 5.487500e-01 : f32
    %12 = vector.broadcast %cst_7 : f32 to vector<16x128xf32>
    %13 = arith.mulf %12, %11 : vector<16x128xf32>
    %c0_8 = arith.constant 0 : index
    %c0_9 = arith.constant 0 : index
    %14 = vector.load %arg5[%c0_8, %c0_9] : memref<16x128xf32, #tpu.memory_space<vmem>>, vector<16x128xf32>
    tpu.vector_store %arg5[%c0_8, %c0_9], %13 {strides = array<i32>} : memref<16x128xf32, #tpu.memory_space<vmem>>, vector<16x128xf32>,
    return
  }
  func.func @transform_0(%arg0: i32) -> (i32, i32) {
    %c0_i32 = arith.constant 0 : i32
    %c0_i32_0 = arith.constant 0 : i32
    return %arg0, %c0_i32 : i32, i32
  }
  func.func @transform_1(%arg0: i32) -> (i32, i32) {
    %c0_i32 = arith.constant 0 : i32
    %c0_i32_0 = arith.constant 0 : i32
    return %arg0, %c0_i32 : i32, i32
  }
  func.func @transform_2(%arg0: i32) -> (i32, i32) {
    %c0_i32 = arith.constant 0 : i32
    %c0_i32_0 = arith.constant 0 : i32
    return %arg0, %c0_i32 : i32, i32
  }
  func.func @transform_3(%arg0: i32) -> (i32, i32) {
    %c0_i32 = arith.constant 0 : i32
    %c0_i32_0 = arith.constant 0 : i32
    return %arg0, %c0_i32 : i32, i32
  }
  func.func @transform_4(%arg0: i32) -> (i32, i32) {
    %c0_i32 = arith.constant 0 : i32
    %c0_i32_0 = arith.constant 0 : i32
    return %arg0, %c0_i32 : i32, i32
  }
}

</mosaic_0001>

<llo_original>
// kernel: tpu_custom_call.1
$region0: #{tpu_custom_call.1}
  #allocation0 [shape = 'u32[]', space=smem, size = 0x4, offset = 0x4, fixed_abs, tag = 'smem constant byte address 0x4 - core index']
  #allocation1 [shape = 'u32[144,128]{1,0:T(1,128)}', space=vmem, size = 0x12000, scoped, tag = 'internal scratch']
  %s0 = inlined_call_operand.hbm [shape: f32[16,128], index: 0, kind: input, shape index: {}]
  %s1 = inlined_call_operand.hbm [shape: f32[16,128], index: 1, kind: input, shape index: {}]
  %s2 = inlined_call_operand.hbm [shape: f32[16,128], index: 2, kind: input, shape index: {}]
  %s3 = inlined_call_operand.hbm [shape: f32[16,128], index: 3, kind: input, shape index: {}]
  %s4 = inlined_call_operand.hbm [shape: f32[16,128], index: 4, kind: output, shape index: {}]
  %s5 = sld [smem:[#allocation0]]
  $region42: #{tpu_custom_call.1} parent=0
    _
  %s7 = ssub.s32 1, %s5
  %s8 = scalar_select 0, %s7, %s5
  $region1: #{tpu_custom_call.1} parent=0
    #allocation2 [shape = 'u8[8192]{0}', space=vmem, size = 0x2000, scoped, tag = 'input window, operand 0, single buffered']
    #allocation3 [shape = 's32[1]{0}', space=sflag, size = 0x4, scoped, tag = 'scoped memory for tpu_custom_call.1']
    #allocation4 [shape = 's32[1]{0}', space=sflag, size = 0x4, scoped, tag = 'scoped memory for tpu_custom_call.1']
    #allocation5 [shape = 'u8[8192]{0}', space=vmem, size = 0x2000, scoped, tag = 'input window, operand 1, single buffered']
    #allocation6 [shape = 's32[1]{0}', space=sflag, size = 0x4, scoped, tag = 'scoped memory for tpu_custom_call.1']
    #allocation7 [shape = 'u8[8192]{0}', space=vmem, size = 0x2000, scoped, tag = 'input window, operand 2, single buffered']
    #allocation8 [shape = 'u8[8192]{0}', space=vmem, size = 0x2000, scoped, tag = 'input window, operand 3, single buffered']
    #allocation9 [shape = 's32[1]{0}', space=sflag, size = 0x4, scoped, tag = 'scoped memory for tpu_custom_call.1']
    #allocation10 [shape = 'u8[8192]{0}', space=vmem, size = 0x2000, scoped, tag = 'output window, operand 0, single buffered']
    %9 = vsyncpa [#allocation3], 0
    %10 = vsyncpa [#allocation6], 0
    %11 = vsyncpa [#allocation9], 0
    %12 = vsyncpa [#allocation4], 0
    // Predicated region
    $region2: #{tpu_custom_call.1} parent=1 // pred_check
      _
    $region3: #{tpu_custom_call.1} parent=1 // pred_check_branch
      %14 = sbr.rel (0) target = $region5
    $region4: #{tpu_custom_call.1} parent=1 // pred_region
      %s16 = ssub.s32 256, 256
      %17 = vsyncadd [#allocation3], %s16
      %s18 = sshll.u32 [#allocation2], 4
      %s19 = int_to_ptr.vmem [resolvable:$true] %s18
      %24 = dma.hbm_to_vmem [thread:$0]  %s0, 256, %s19, [#allocation3], 128, 128, 8
    $region5: #{tpu_custom_call.1} parent=1 // pred_fallthru
      _
    // Predicated region
    $region6: #{tpu_custom_call.1} parent=1 // pred_check
      _
    $region7: #{tpu_custom_call.1} parent=1 // pred_check_branch
      %26 = sbr.rel (0) target = $region9
    $region8: #{tpu_custom_call.1} parent=1 // pred_region
      %s28 = ssub.s32 256, 256
      %29 = vsyncadd [#allocation6], %s28
      %s30 = sshll.u32 [#allocation5], 4
      %s31 = int_to_ptr.vmem [resolvable:$true] %s30
      %36 = dma.hbm_to_vmem [thread:$0]  %s1, 256, %s31, [#allocation6], 128, 128, 8
    $region9: #{tpu_custom_call.1} parent=1 // pred_fallthru
      _
    // Predicated region
    $region10: #{tpu_custom_call.1} parent=1 // pred_check
      _
    $region11: #{tpu_custom_call.1} parent=1 // pred_check_branch
      %38 = sbr.rel (0) target = $region13
    $region12: #{tpu_custom_call.1} parent=1 // pred_region
      %s40 = ssub.s32 256, 256
      %41 = vsyncadd [#allocation6], %s40
      %s42 = sshll.u32 [#allocation7], 4
      %s43 = int_to_ptr.vmem [resolvable:$true] %s42
      %48 = dma.hbm_to_vmem [thread:$0]  %s2, 256, %s43, [#allocation6], 128, 128, 8
    $region13: #{tpu_custom_call.1} parent=1 // pred_fallthru
      _
    // Predicated region
    $region14: #{tpu_custom_call.1} parent=1 // pred_check
      _
    $region15: #{tpu_custom_call.1} parent=1 // pred_check_branch
      %50 = sbr.rel (0) target = $region17
    $region16: #{tpu_custom_call.1} parent=1 // pred_region
      %s52 = ssub.s32 256, 256
      %53 = vsyncadd [#allocation9], %s52
      %s54 = sshll.u32 [#allocation8], 4
      %s55 = int_to_ptr.vmem [resolvable:$true] %s54
      %60 = dma.hbm_to_vmem [thread:$0]  %s3, 256, %s55, [#allocation9], 128, 128, 8
    $region17: #{tpu_custom_call.1} parent=1 // pred_fallthru
      _
    // Predicated region
    $region18: #{tpu_custom_call.1} parent=1 // pred_check
      _
    $region19: #{tpu_custom_call.1} parent=1 // pred_check_branch
      %62 = sbr.rel (0) target = $region21
    $region20: #{tpu_custom_call.1} parent=1 // pred_region
      %63 = dma.done [#allocation3], 256
    $region21: #{tpu_custom_call.1} parent=1 // pred_fallthru
      _
    // Predicated region
    $region22: #{tpu_custom_call.1} parent=1 // pred_check
      _
    $region23: #{tpu_custom_call.1} parent=1 // pred_check_branch
      %65 = sbr.rel (0) target = $region25
    $region24: #{tpu_custom_call.1} parent=1 // pred_region
      %66 = dma.done [#allocation6], 256
    $region25: #{tpu_custom_call.1} parent=1 // pred_fallthru
      _
    // Predicated region
    $region26: #{tpu_custom_call.1} parent=1 // pred_check
      _
    $region27: #{tpu_custom_call.1} parent=1 // pred_check_branch
      %68 = sbr.rel (0) target = $region29
    $region28: #{tpu_custom_call.1} parent=1 // pred_region
      %69 = dma.done [#allocation6], 256
    $region29: #{tpu_custom_call.1} parent=1 // pred_fallthru
      _
    // Predicated region
    $region30: #{tpu_custom_call.1} parent=1 // pred_check
      _
    $region31: #{tpu_custom_call.1} parent=1 // pred_check_branch
      %71 = sbr.rel (0) target = $region33
    $region32: #{tpu_custom_call.1} parent=1 // pred_region
      %72 = dma.done [#allocation9], 256
    $region33: #{tpu_custom_call.1} parent=1 // pred_fallthru
      _
    %v73 = vld [vmem:[#allocation2] sm:$0xff]
    %v74 = vld [vmem:[#allocation2 + $0x8] sm:$0xff]
    %v75 = vld [vmem:[#allocation5] sm:$0xff]
    %v76 = vld [vmem:[#allocation5 + $0x8] sm:$0xff]
    %v77 = vld [vmem:[#allocation7] sm:$0xff]
    %v78 = vld [vmem:[#allocation7 + $0x8] sm:$0xff]
    %v79 = vld [vmem:[#allocation8] sm:$0xff]
    %v80 = vld [vmem:[#allocation8 + $0x8] sm:$0xff]
    %v81 = vsub.f32 %v73, %v77
    %v82 = vsub.f32 %v74, %v78
    %v83 = vsub.f32 %v75, %v79
    %v84 = vsub.f32 %v76, %v80
    %v85 = vmul.f32 %v81, %v81
    %v86 = vmul.f32 %v82, %v82
    %v87 = vmul.f32 %v83, %v83
    %v88 = vmul.f32 %v84, %v84
    %v89 = vadd.f32 %v85, %v87
    %v90 = vadd.f32 %v86, %v88
    %v91 = vmul.f32 %v89, 6.0
    %v92 = vmul.f32 %v90, 6.0
    %v93 = vmul.f32 %v91, 1.442695
    %v94 = vpow.pop %v93
    %v95 = vmul.f32 %v92, 1.442695
    %v96 = vpow.pop %v95
    %v97 = vmul.f32 %v94, 0.54875
    %v98 = vmul.f32 %v96, 0.54875
    %99 = vst [vmem:[#allocation10] sm:$0xff] %v97
    %100 = vst [vmem:[#allocation10 + $0x8] sm:$0xff] %v98
    // Predicated region
    $region34: #{tpu_custom_call.1} parent=1 // pred_check
      _
    $region35: #{tpu_custom_call.1} parent=1 // pred_check_branch
      %102 = sbr.rel (0) target = $region37
    $region36: #{tpu_custom_call.1} parent=1 // pred_region
      %s104 = ssub.s32 256, 256
      %105 = vsyncadd [#allocation4], %s104
      %s106 = sshll.u32 [#allocation10], 4
      %s107 = int_to_ptr.vmem [resolvable:$true] %s106
      %112 = dma.vmem_to_hbm [thread:$0]  %s107, 256, %s4, [#allocation4], 128, 128, 8
    $region37: #{tpu_custom_call.1} parent=1 // pred_fallthru
      _
    // Predicated region
    $region38: #{tpu_custom_call.1} parent=1 // pred_check
      _
    $region39: #{tpu_custom_call.1} parent=1 // pred_check_branch
      %114 = sbr.rel (0) target = $region41
    $region40: #{tpu_custom_call.1} parent=1 // pred_region
      %115 = dma.done [#allocation4], 256
    $region41: #{tpu_custom_call.1} parent=1 // pred_fallthru
      _
    %116 = vsyncpa [#allocation3], 1
    %117 = vsyncpa [#allocation6], 1
    %118 = vsyncpa [#allocation9], 1
    %119 = vsyncpa [#allocation4], 1

</llo_original>
